<compile_context>
chip_gen: v6e
topology: v6e:2x2x1
jax: 0.10.0
libtpu: 0.0.40
codegen_flags: <defaults>
</compile_context>

<pallas_src>
import jax
import jax.numpy as jnp
from jax.experimental import pallas as pl
from jax.experimental.pallas import tpu as pltpu

BN_EPS = 1e-5


def _cdiv(a, b):
    return -(-a // b)


def _round_up(x, m):
    return ((x + m - 1) // m) * m


def subnet_kernel(x_ref, w1_ref, b1_ref, w2_ref, b2_ref, w3_ref, b3_ref, o_ref):
    """Three dot + bias + relu layers. BatchNorm is folded into (w1, b1) wrapper-side;
    dropout is identity in eval mode."""
    # TODO(synk): train-mode dropout would use pltpu.prng_seed + pltpu.prng_random_bits.

    def layer(h, w_ref, b_ref):
        acc = jnp.dot(h.astype(w_ref.dtype), w_ref[...],
                      preferred_element_type=jnp.float32)
        # Epilogue in the bias dtype: bf16 on v6e/v7x (bf16-native VPU), f32 on v5e/f32 path.
        return jnp.maximum(acc.astype(b_ref.dtype) + b_ref[...], 0.0)

    y = layer(x_ref[...], w1_ref, b1_ref)
    y = layer(y, w2_ref, b2_ref)
    y = layer(y, w3_ref, b3_ref)
    o_ref[...] = y.astype(o_ref.dtype)


def _tpu_kind():
    try:
        return jax.devices()[0].device_kind.lower()
    except Exception:
        return ""


def _vmem_capacity_bytes(is_v7x):
    try:
        return int(pltpu.get_tpu_info().vmem_capacity_bytes)
    except Exception:
        # v7x: 64 MiB per TensorCore; v4/v5e/v5p/v6e: 128 MiB.
        return (64 if is_v7x else 128) * 1024 * 1024


def subnet_forward(x, params, *, tile_m=512, matmul_dtype=jnp.bfloat16,
                   out_dtype=None, x_buffer_count=2):
    """x: (B, in_size) float32. params: dict of SubNet parameters (see init_params).

    Returns (B, hidden) in `matmul_dtype` unless `out_dtype` is given; the upcast (if
    requested) happens wrapper-side so the kernel's HBM writeback stays narrow.
    """
    B, in_size = x.shape
    hidden = params["w1"].shape[1]

    kind = _tpu_kind()
    is_v7x = "v7" in kind
    # v5e (and older) VPUs lack native bf16 -> keep the bias/relu epilogue in f32 there.
    has_bf16_vpu = not any(t in kind for t in ("v5 lite", "v5e", "v4", "v3", "v2"))
    matmul_dtype = jnp.dtype(matmul_dtype)
    epi_dtype = (jnp.dtype(jnp.bfloat16)
                 if (matmul_dtype == jnp.dtype(jnp.bfloat16) and has_bf16_vpu)
                 else jnp.dtype(jnp.float32))

    # ---- Fold eval-mode BatchNorm1d into the first linear layer (in f32) ------------
    scale = params["gamma"] * jax.lax.rsqrt(params["var"] + BN_EPS)      # (1, in)
    shift = params["beta"] - params["mean"] * scale                      # (1, in)
    w1_fold = params["w1"] * scale.reshape(in_size, 1)                   # (in, hidden)
    b1_fold = params["b1"] + shift @ params["w1"]                        # (1, hidden)

    # ---- Lane-dense padding: feature dims -> multiples of 128 ------------------------
    in_pad = _round_up(in_size, 128)
    hid_pad = _round_up(hidden, 128)

    # ---- Batch tiling: packed-sublane aligned, balanced, >= 2 grid steps on v7x ------
    row_align = max(8, 32 // matmul_dtype.itemsize)      # f32:8  bf16:16  int8/fp8:32
    tile_m = max(int(tile_m), row_align)
    num_tiles = _cdiv(B, tile_m)
    if is_v7x and num_tiles == 1 and B >= 2 * row_align:
        num_tiles = 2                                    # keep both TensorCores busy
    tm = _round_up(_cdiv(B, num_tiles), row_align)       # balanced -> last tile ~full
    b_pad = num_tiles * tm
    grid = (num_tiles,)

    def pad2(a, r, c, dtype):
        return jnp.pad(a, ((0, r - a.shape[0]), (0, c - a.shape[1]))).astype(dtype)

    x_p = pad2(x, b_pad, in_pad, matmul_dtype)
    w1_p = pad2(w1_fold, in_pad, hid_pad, matmul_dtype)
    w2_p = pad2(params["w2"], hid_pad, hid_pad, matmul_dtype)
    w3_p = pad2(params["w3"], hid_pad, hid_pad, matmul_dtype)
    b1_p = pad2(b1_fold, 1, hid_pad, epi_dtype)
    b2_p = pad2(params["b2"], 1, hid_pad, epi_dtype)
    b3_p = pad2(params["b3"], 1, hid_pad, epi_dtype)

    wbytes = matmul_dtype.itemsize
    ebytes = epi_dtype.itemsize
    obytes = wbytes                                       # output written in matmul dtype

    weight_bytes = (w1_p.size + w2_p.size + w3_p.size) * wbytes
    bias_bytes = (b1_p.size + b2_p.size + b3_p.size) * ebytes
    # TODO(synk): when 2*weight_bytes approaches the VMEM capacity (hid_pad >~ 2k bf16 on
    # v7x), add a second grid axis tiling the weights' output columns instead of keeping
    # W1/W2/W3 fully VMEM-resident (and optionally fp8 weights on v7x).
    vmem_est = (2 * weight_bytes + 2 * bias_bytes          # worst case: double-buffered
                + x_buffer_count * tm * in_pad * wbytes    # pipelined x tiles
                + 2 * tm * hid_pad * obytes                # pipelined out tiles
                + 3 * tm * hid_pad * 4)                    # f32 matmul accumulators
    vmem_cap = _vmem_capacity_bytes(is_v7x)
    vmem_limit = int(min(max(int(1.25 * vmem_est), 32 * 1024 * 1024),
                         int(0.9 * vmem_cap)))

    flops = 2 * b_pad * (in_pad * hid_pad + 2 * hid_pad * hid_pad)
    bytes_accessed = (x_p.size * wbytes + weight_bytes + bias_bytes
                      + b_pad * hid_pad * obytes)

    def build_call(single_buffer_weights):
        def const_spec(shape):
            if single_buffer_weights:
                return pl.BlockSpec(shape, lambda i: (0, 0),
                                    pipeline_mode=pl.Buffered(1))
            return pl.BlockSpec(shape, lambda i: (0, 0))

        if x_buffer_count == 2:
            x_spec = pl.BlockSpec((tm, in_pad), lambda i: (i, 0))
        else:
            # Deeper prefetch if profiling shows exposed x-tile DMA at small hidden.
            x_spec = pl.BlockSpec((tm, in_pad), lambda i: (i, 0),
                                  pipeline_mode=pl.Buffered(x_buffer_count))

        return pl.pallas_call(
            subnet_kernel,
            out_shape=jax.ShapeDtypeStruct((b_pad, hid_pad), matmul_dtype),
            grid=grid,
            in_specs=[
                x_spec,                           # x tile (HBM<->VMEM pipelined)
                const_spec((in_pad, hid_pad)),    # W1 (VMEM-resident)
                const_spec((1, hid_pad)),         # b1
                const_spec((hid_pad, hid_pad)),   # W2
                const_spec((1, hid_pad)),         # b2
                const_spec((hid_pad, hid_pad)),   # W3
                const_spec((1, hid_pad)),         # b3
            ],
            out_specs=pl.BlockSpec((tm, hid_pad), lambda i: (i, 0)),
            compiler_params=pltpu.CompilerParams(
                dimension_semantics=("parallel",),
                vmem_limit_bytes=vmem_limit,
            ),
            cost_estimate=pl.CostEstimate(
                flops=flops, transcendentals=0, bytes_accessed=bytes_accessed),
        )

    args = (x_p, w1_p, b1_p, w2_p, b2_p, w3_p, b3_p)
    try:
        out = build_call(True)(*args)
    except Exception:
        # pipeline_mode=pl.Buffered(1) unsupported on this JAX/Mosaic build; fall back to
        # default double-buffered weights (costs VMEM only, never correctness).
        out = build_call(False)(*args)

    # Padded rows/columns are zeros by construction; slice back to the real shape.
    out = out[:B, :hidden]
    if out_dtype is not None:
        out = out.astype(out_dtype)
    return out


def subnet_reference(x, p):
    """Pure-JAX f32 reference of the same forward pass (eval mode)."""
    normed = (x - p["mean"]) * jax.lax.rsqrt(p["var"] + BN_EPS) * p["gamma"] + p["beta"]
    y1 = jnp.maximum(normed @ p["w1"] + p["b1"], 0.0)
    y2 = jnp.maximum(y1 @ p["w2"] + p["b2"], 0.0)
    y3 = jnp.maximum(y2 @ p["w3"] + p["b3"], 0.0)
    return y3


def init_params(key, in_size, hidden):
    ks = jax.random.split(key, 10)
    s = 0.1
    return {
        "gamma": 1.0 + s * jax.random.normal(ks[0], (1, in_size), jnp.float32),
        "beta":  s * jax.random.normal(ks[1], (1, in_size), jnp.float32),
        "mean":  s * jax.random.normal(ks[2], (1, in_size), jnp.float32),
        "var":   1.0 + s * jax.random.uniform(ks[3], (1, in_size), jnp.float32),
        "w1": s * jax.random.normal(ks[4], (in_size, hidden), jnp.float32),
        "b1": s * jax.random.normal(ks[5], (1, hidden), jnp.float32),
        "w2": s * jax.random.normal(ks[6], (hidden, hidden), jnp.float32),
        "b2": s * jax.random.normal(ks[7], (1, hidden), jnp.float32),
        "w3": s * jax.random.normal(ks[8], (hidden, hidden), jnp.float32),
        "b3": s * jax.random.normal(ks[9], (1, hidden), jnp.float32),
    }


if __name__ == "__main__":
    key = jax.random.PRNGKey(0)
    k_x, k_p = jax.random.split(key)

    batch, in_size, hidden = 8, 16, 32
    x = jax.random.normal(k_x, (batch, in_size), jnp.float32)
    params = init_params(k_p, in_size, hidden)

    ref = subnet_reference(x, params)

    # f32 matmul path: must match the reference tightly (checks BN fold + padding).
    out_f32 = jax.block_until_ready(
        subnet_forward(x, params, matmul_dtype=jnp.float32, out_dtype=jnp.float32))
    assert out_f32.shape == (batch, hidden)
    assert jnp.allclose(out_f32, ref, atol=1e-5, rtol=1e-5), "f32 mismatch vs reference"

    # bf16 matmul fast path (default): bf16 MXU operands, bf16 writeback, loose tolerance.
    out_bf16 = jax.block_until_ready(subnet_forward(x, params))
    assert out_bf16.shape == (batch, hidden)
    assert jnp.allclose(out_bf16.astype(jnp.float32), ref, atol=5e-2, rtol=5e-2), \
        "bf16 mismatch vs reference"

    print("KERNEL_OK")
</pallas_src>

<mosaic_0001>
module attributes {stable_mosaic.version = 11 : i64} {
  func.func @subnet_kernel(%arg0: i32, %arg1: memref<8x128xf32, #tpu.memory_space<vmem>>, %arg2: memref<128x128xf32, #tpu.memory_space<vmem>>, %arg3: memref<1x128xf32, #tpu.memory_space<vmem>>, %arg4: memref<128x128xf32, #tpu.memory_space<vmem>>, %arg5: memref<1x128xf32, #tpu.memory_space<vmem>>, %arg6: memref<128x128xf32, #tpu.memory_space<vmem>>, %arg7: memref<1x128xf32, #tpu.memory_space<vmem>>, %arg8: memref<8x128xf32, #tpu.memory_space<vmem>>) attributes {dimension_semantics = [#tpu.dimension_semantics<parallel>], iteration_bounds = array<i64: 1>, scalar_prefetch = 0 : i64, scratch_operands = 0 : i64, tpu.core_type = #tpu.core_type<tc>, window_params = [{transform_indices = @transform_0, window_bounds = array<i64: 8, 128>}, {pipeline_mode = #tpu.pipeline_mode<synchronous>, transform_indices = @transform_1, window_bounds = array<i64: 128, 128>}, {pipeline_mode = #tpu.pipeline_mode<synchronous>, transform_indices = @transform_2, window_bounds = array<i64: 1, 128>}, {pipeline_mode = #tpu.pipeline_mode<synchronous>, transform_indices = @transform_3, window_bounds = array<i64: 128, 128>}, {pipeline_mode = #tpu.pipeline_mode<synchronous>, transform_indices = @transform_4, window_bounds = array<i64: 1, 128>}, {pipeline_mode = #tpu.pipeline_mode<synchronous>, transform_indices = @transform_5, window_bounds = array<i64: 128, 128>}, {pipeline_mode = #tpu.pipeline_mode<synchronous>, transform_indices = @transform_6, window_bounds = array<i64: 1, 128>}, {transform_indices = @transform_7, window_bounds = array<i64: 8, 128>}]} {
    %c0 = arith.constant 0 : index
    %c0_0 = arith.constant 0 : index
    %0 = vector.load %arg1[%c0, %c0_0] : memref<8x128xf32, #tpu.memory_space<vmem>>, vector<8x128xf32>
    %c0_1 = arith.constant 0 : index
    %c0_2 = arith.constant 0 : index
    %1 = vector.load %arg2[%c0_1, %c0_2] : memref<128x128xf32, #tpu.memory_space<vmem>>, vector<128x128xf32>
    %cst = arith.constant dense<0.000000e+00> : vector<8x128xf32>
    %2 = tpu.matmul %0, %1, %cst {dimension_numbers = #tpu.dot_dimension_numbers<[1], [0], [0], [1], [0, 0, 1, 1], [], []>} : vector<8x128xf32>, vector<128x128xf32>, vector<8x128xf32> -> vector<8x128xf32>
    %c0_3 = arith.constant 0 : index
    %c0_4 = arith.constant 0 : index
    %3 = vector.load %arg3[%c0_3, %c0_4] : memref<1x128xf32, #tpu.memory_space<vmem>>, vector<1x128xf32>
    %4 = vector.broadcast %3 : vector<1x128xf32> to vector<8x128xf32>
    %5 = arith.addf %2, %4 : vector<8x128xf32>
    %cst_5 = arith.constant 0.000000e+00 : f32
    %6 = vector.broadcast %cst_5 : f32 to vector<8x128xf32>
    %7 = arith.maximumf %5, %6 : vector<8x128xf32>
    %c0_6 = arith.constant 0 : index
    %c0_7 = arith.constant 0 : index
    %8 = vector.load %arg4[%c0_6, %c0_7] : memref<128x128xf32, #tpu.memory_space<vmem>>, vector<128x128xf32>
    %cst_8 = arith.constant dense<0.000000e+00> : vector<8x128xf32>
    %9 = tpu.matmul %7, %8, %cst_8 {dimension_numbers = #tpu.dot_dimension_numbers<[1], [0], [0], [1], [0, 0, 1, 1], [], []>} : vector<8x128xf32>, vector<128x128xf32>, vector<8x128xf32> -> vector<8x128xf32>
    %c0_9 = arith.constant 0 : index
    %c0_10 = arith.constant 0 : index
    %10 = vector.load %arg5[%c0_9, %c0_10] : memref<1x128xf32, #tpu.memory_space<vmem>>, vector<1x128xf32>
    %11 = vector.broadcast %10 : vector<1x128xf32> to vector<8x128xf32>
    %12 = arith.addf %9, %11 : vector<8x128xf32>
    %cst_11 = arith.constant 0.000000e+00 : f32
    %13 = vector.broadcast %cst_11 : f32 to vector<8x128xf32>
    %14 = arith.maximumf %12, %13 : vector<8x128xf32>
    %c0_12 = arith.constant 0 : index
    %c0_13 = arith.constant 0 : index
    %15 = vector.load %arg6[%c0_12, %c0_13] : memref<128x128xf32, #tpu.memory_space<vmem>>, vector<128x128xf32>
    %cst_14 = arith.constant dense<0.000000e+00> : vector<8x128xf32>
    %16 = tpu.matmul %14, %15, %cst_14 {dimension_numbers = #tpu.dot_dimension_numbers<[1], [0], [0], [1], [0, 0, 1, 1], [], []>} : vector<8x128xf32>, vector<128x128xf32>, vector<8x128xf32> -> vector<8x128xf32>
    %c0_15 = arith.constant 0 : index
    %c0_16 = arith.constant 0 : index
    %17 = vector.load %arg7[%c0_15, %c0_16] : memref<1x128xf32, #tpu.memory_space<vmem>>, vector<1x128xf32>
    %18 = vector.broadcast %17 : vector<1x128xf32> to vector<8x128xf32>
    %19 = arith.addf %16, %18 : vector<8x128xf32>
    %cst_17 = arith.constant 0.000000e+00 : f32
    %20 = vector.broadcast %cst_17 : f32 to vector<8x128xf32>
    %21 = arith.maximumf %19, %20 : vector<8x128xf32>
    %c0_18 = arith.constant 0 : index
    %c0_19 = arith.constant 0 : index
    %22 = vector.load %arg8[%c0_18, %c0_19] : memref<8x128xf32, #tpu.memory_space<vmem>>, vector<8x128xf32>
    tpu.vector_store %arg8[%c0_18, %c0_19], %21 {strides = array<i32>} : memref<8x128xf32, #tpu.memory_space<vmem>>, vector<8x128xf32>,
    return
  }
  func.func @transform_0(%arg0: i32) -> (i32, i32) {
    %c0_i32 = arith.constant 0 : i32
    %c0_i32_0 = arith.constant 0 : i32
    return %arg0, %c0_i32 : i32, i32
  }
  func.func @transform_1(%arg0: i32) -> (i32, i32) {
    %c0_i32 = arith.constant 0 : i32
    %c0_i32_0 = arith.constant 0 : i32
    %c0_i32_1 = arith.constant 0 : i32
    return %c0_i32, %c0_i32_0 : i32, i32
  }
  func.func @transform_2(%arg0: i32) -> (i32, i32) {
    %c0_i32 = arith.constant 0 : i32
    %c0_i32_0 = arith.constant 0 : i32
    %c0_i32_1 = arith.constant 0 : i32
    return %c0_i32, %c0_i32_0 : i32, i32
  }
  func.func @transform_3(%arg0: i32) -> (i32, i32) {
    %c0_i32 = arith.constant 0 : i32
    %c0_i32_0 = arith.constant 0 : i32
    %c0_i32_1 = arith.constant 0 : i32
    return %c0_i32, %c0_i32_0 : i32, i32
  }
  func.func @transform_4(%arg0: i32) -> (i32, i32) {
    %c0_i32 = arith.constant 0 : i32
    %c0_i32_0 = arith.constant 0 : i32
    %c0_i32_1 = arith.constant 0 : i32
    return %c0_i32, %c0_i32_0 : i32, i32
  }
  func.func @transform_5(%arg0: i32) -> (i32, i32) {
    %c0_i32 = arith.constant 0 : i32
    %c0_i32_0 = arith.constant 0 : i32
    %c0_i32_1 = arith.constant 0 : i32
    return %c0_i32, %c0_i32_0 : i32, i32
  }
  func.func @transform_6(%arg0: i32) -> (i32, i32) {
    %c0_i32 = arith.constant 0 : i32
    %c0_i32_0 = arith.constant 0 : i32
    %c0_i32_1 = arith.constant 0 : i32
    return %c0_i32, %c0_i32_0 : i32, i32
  }
  func.func @transform_7(%arg0: i32) -> (i32, i32) {
    %c0_i32 = arith.constant 0 : i32
    %c0_i32_0 = arith.constant 0 : i32
    return %arg0, %c0_i32 : i32, i32
  }
}

module attributes {stable_mosaic.version = 11 : i64} {
  func.func @subnet_kernel(%arg0: i32, %arg1: memref<8x128xf32, #tpu.memory_space<vmem>>, %arg2: memref<128x128xf32, #tpu.memory_space<vmem>>, %arg3: memref<1x128xf32, #tpu.memory_space<vmem>>, %arg4: memref<128x128xf32, #tpu.memory_space<vmem>>, %arg5: memref<1x128xf32, #tpu.memory_space<vmem>>, %arg6: memref<128x128xf32, #tpu.memory_space<vmem>>, %arg7: memref<1x128xf32, #tpu.memory_space<vmem>>, %arg8: memref<8x128xf32, #tpu.memory_space<vmem>>) attributes {dimension_semantics = [#tpu.dimension_semantics<parallel>], iteration_bounds = array<i64: 1>, scalar_prefetch = 0 : i64, scratch_operands = 0 : i64, tpu.core_type = #tpu.core_type<tc>, window_params = [{transform_indices = @transform_0, window_bounds = array<i64: 8, 128>}, {pipeline_mode = #tpu.pipeline_mode<synchronous>, transform_indices = @transform_1, window_bounds = array<i64: 128, 128>}, {pipeline_mode = #tpu.pipeline_mode<synchronous>, transform_indices = @transform_2, window_bounds = array<i64: 1, 128>}, {pipeline_mode = #tpu.pipeline_mode<synchronous>, transform_indices = @transform_3, window_bounds = array<i64: 128, 128>}, {pipeline_mode = #tpu.pipeline_mode<synchronous>, transform_indices = @transform_4, window_bounds = array<i64: 1, 128>}, {pipeline_mode = #tpu.pipeline_mode<synchronous>, transform_indices = @transform_5, window_bounds = array<i64: 128, 128>}, {pipeline_mode = #tpu.pipeline_mode<synchronous>, transform_indices = @transform_6, window_bounds = array<i64: 1, 128>}, {transform_indices = @transform_7, window_bounds = array<i64: 8, 128>}]} {
    %c0 = arith.constant 0 : index
    %c0_0 = arith.constant 0 : index
    %0 = vector.load %arg1[%c0, %c0_0] : memref<8x128xf32, #tpu.memory_space<vmem>>, vector<8x128xf32>
    %c0_1 = arith.constant 0 : index
    %c0_2 = arith.constant 0 : index
    %1 = vector.load %arg2[%c0_1, %c0_2] : memref<128x128xf32, #tpu.memory_space<vmem>>, vector<128x128xf32>
    %cst = arith.constant dense<0.000000e+00> : vector<8x128xf32>
    %2 = tpu.matmul %0, %1, %cst {dimension_numbers = #tpu.dot_dimension_numbers<[1], [0], [0], [1], [0, 0, 1, 1], [], []>} : vector<8x128xf32>, vector<128x128xf32>, vector<8x128xf32> -> vector<8x128xf32>
    %c0_3 = arith.constant 0 : index
    %c0_4 = arith.constant 0 : index
    %3 = vector.load %arg3[%c0_3, %c0_4] : memref<1x128xf32, #tpu.memory_space<vmem>>, vector<1x128xf32>
    %4 = vector.broadcast %3 : vector<1x128xf32> to vector<8x128xf32>
    %5 = arith.addf %2, %4 : vector<8x128xf32>
    %cst_5 = arith.constant 0.000000e+00 : f32
    %6 = vector.broadcast %cst_5 : f32 to vector<8x128xf32>
    %7 = arith.maximumf %5, %6 : vector<8x128xf32>
    %c0_6 = arith.constant 0 : index
    %c0_7 = arith.constant 0 : index
    %8 = vector.load %arg4[%c0_6, %c0_7] : memref<128x128xf32, #tpu.memory_space<vmem>>, vector<128x128xf32>
    %cst_8 = arith.constant dense<0.000000e+00> : vector<8x128xf32>
    %9 = tpu.matmul %7, %8, %cst_8 {dimension_numbers = #tpu.dot_dimension_numbers<[1], [0], [0], [1], [0, 0, 1, 1], [], []>} : vector<8x128xf32>, vector<128x128xf32>, vector<8x128xf32> -> vector<8x128xf32>
    %c0_9 = arith.constant 0 : index
    %c0_10 = arith.constant 0 : index
    %10 = vector.load %arg5[%c0_9, %c0_10] : memref<1x128xf32, #tpu.memory_space<vmem>>, vector<1x128xf32>
    %11 = vector.broadcast %10 : vector<1x128xf32> to vector<8x128xf32>
    %12 = arith.addf %9, %11 : vector<8x128xf32>
    %cst_11 = arith.constant 0.000000e+00 : f32
    %13 = vector.broadcast %cst_11 : f32 to vector<8x128xf32>
    %14 = arith.maximumf %12, %13 : vector<8x128xf32>
    %c0_12 = arith.constant 0 : index
    %c0_13 = arith.constant 0 : index
    %15 = vector.load %arg6[%c0_12, %c0_13] : memref<128x128xf32, #tpu.memory_space<vmem>>, vector<128x128xf32>
    %cst_14 = arith.constant dense<0.000000e+00> : vector<8x128xf32>
    %16 = tpu.matmul %14, %15, %cst_14 {dimension_numbers = #tpu.dot_dimension_numbers<[1], [0], [0], [1], [0, 0, 1, 1], [], []>} : vector<8x128xf32>, vector<128x128xf32>, vector<8x128xf32> -> vector<8x128xf32>
    %c0_15 = arith.constant 0 : index
    %c0_16 = arith.constant 0 : index
    %17 = vector.load %arg7[%c0_15, %c0_16] : memref<1x128xf32, #tpu.memory_space<vmem>>, vector<1x128xf32>
    %18 = vector.broadcast %17 : vector<1x128xf32> to vector<8x128xf32>
    %19 = arith.addf %16, %18 : vector<8x128xf32>
    %cst_17 = arith.constant 0.000000e+00 : f32
    %20 = vector.broadcast %cst_17 : f32 to vector<8x128xf32>
    %21 = arith.maximumf %19, %20 : vector<8x128xf32>
    %c0_18 = arith.constant 0 : index
    %c0_19 = arith.constant 0 : index
    %22 = vector.load %arg8[%c0_18, %c0_19] : memref<8x128xf32, #tpu.memory_space<vmem>>, vector<8x128xf32>
    tpu.vector_store %arg8[%c0_18, %c0_19], %21 {strides = array<i32>} : memref<8x128xf32, #tpu.memory_space<vmem>>, vector<8x128xf32>,
    return
  }
  func.func @transform_0(%arg0: i32) -> (i32, i32) {
    %c0_i32 = arith.constant 0 : i32
    %c0_i32_0 = arith.constant 0 : i32
    return %arg0, %c0_i32 : i32, i32
  }
  func.func @transform_1(%arg0: i32) -> (i32, i32) {
    %c0_i32 = arith.constant 0 : i32
    %c0_i32_0 = arith.constant 0 : i32
    %c0_i32_1 = arith.constant 0 : i32
    return %c0_i32, %c0_i32_0 : i32, i32
  }
  func.func @transform_2(%arg0: i32) -> (i32, i32) {
    %c0_i32 = arith.constant 0 : i32
    %c0_i32_0 = arith.constant 0 : i32
    %c0_i32_1 = arith.constant 0 : i32
    return %c0_i32, %c0_i32_0 : i32, i32
  }
  func.func @transform_3(%arg0: i32) -> (i32, i32) {
    %c0_i32 = arith.constant 0 : i32
    %c0_i32_0 = arith.constant 0 : i32
    %c0_i32_1 = arith.constant 0 : i32
    return %c0_i32, %c0_i32_0 : i32, i32
  }
  func.func @transform_4(%arg0: i32) -> (i32, i32) {
    %c0_i32 = arith.constant 0 : i32
    %c0_i32_0 = arith.constant 0 : i32
    %c0_i32_1 = arith.constant 0 : i32
    return %c0_i32, %c0_i32_0 : i32, i32
  }
  func.func @transform_5(%arg0: i32) -> (i32, i32) {
    %c0_i32 = arith.constant 0 : i32
    %c0_i32_0 = arith.constant 0 : i32
    %c0_i32_1 = arith.constant 0 : i32
    return %c0_i32, %c0_i32_0 : i32, i32
  }
  func.func @transform_6(%arg0: i32) -> (i32, i32) {
    %c0_i32 = arith.constant 0 : i32
    %c0_i32_0 = arith.constant 0 : i32
    %c0_i32_1 = arith.constant 0 : i32
    return %c0_i32, %c0_i32_0 : i32, i32
  }
  func.func @transform_7(%arg0: i32) -> (i32, i32) {
    %c0_i32 = arith.constant 0 : i32
    %c0_i32_0 = arith.constant 0 : i32
    return %arg0, %c0_i32 : i32, i32
  }
}

</mosaic_0001>

<llo_original>
// kernel: tpu_custom_call.1
$region0: #{tpu_custom_call.1}
  #allocation0 [shape = 'u32[]', space=smem, size = 0x4, offset = 0x4, fixed_abs, tag = 'smem constant byte address 0x4 - core index']
  #allocation1 [shape = 'u32[144,128]{1,0:T(1,128)}', space=vmem, size = 0x12000, scoped, tag = 'internal scratch']
  %s0 = inlined_call_operand.hbm [shape: f32[8,128], index: 0, kind: input, shape index: {}]
  %s1 = inlined_call_operand.hbm [shape: f32[128,128], index: 1, kind: input, shape index: {}]
  %s2 = inlined_call_operand.vmem [shape: f32[1,128], index: 2, kind: input, shape index: {}]
  %s3 = inlined_call_operand.hbm [shape: f32[128,128], index: 3, kind: input, shape index: {}]
  %s4 = inlined_call_operand.vmem [shape: f32[1,128], index: 4, kind: input, shape index: {}]
  %s5 = inlined_call_operand.hbm [shape: f32[128,128], index: 5, kind: input, shape index: {}]
  %s6 = inlined_call_operand.vmem [shape: f32[1,128], index: 6, kind: input, shape index: {}]
  %s7 = inlined_call_operand.hbm [shape: f32[8,128], index: 7, kind: output, shape index: {}]
  %s8 = sld [smem:[#allocation0]]
  $region54: #{tpu_custom_call.1} parent=0
    _
  %s10 = ssub.s32 1, %s8
  %s11 = scalar_select 0, %s10, %s8
  $region1: #{tpu_custom_call.1} parent=0
    #allocation2 [shape = 'u8[4096]{0}', space=vmem, size = 0x1000, scoped, tag = 'input window, operand 0, single buffered']
    #allocation3 [shape = 's32[1]{0}', space=sflag, size = 0x4, scoped, tag = 'scoped memory for tpu_custom_call.1']
    #allocation4 [shape = 's32[1]{0}', space=sflag, size = 0x4, scoped, tag = 'scoped memory for tpu_custom_call.1']
    #allocation5 [shape = 'u8[65536]{0}', space=vmem, size = 0x10000, scoped, tag = 'input window, operand 1, single buffered']
    #allocation6 [shape = 's32[1]{0}', space=sflag, size = 0x4, scoped, tag = 'scoped memory for tpu_custom_call.1']
    #allocation7 [shape = 'u8[65536]{0}', space=vmem, size = 0x10000, scoped, tag = 'input window, operand 3, single buffered']
    #allocation8 [shape = 'u8[65536]{0}', space=vmem, size = 0x10000, scoped, tag = 'input window, operand 5, single buffered']
    #allocation9 [shape = 's32[1]{0}', space=sflag, size = 0x4, scoped, tag = 'scoped memory for tpu_custom_call.1']
    #allocation10 [shape = 'u8[4096]{0}', space=vmem, size = 0x1000, scoped, tag = 'output window, operand 0, single buffered']
    %12 = vsyncpa [#allocation3], 0
    %13 = vsyncpa [#allocation6], 0
    %14 = vsyncpa [#allocation9], 0
    %15 = vsyncpa [#allocation4], 0
    // Predicated region
    $region2: #{tpu_custom_call.1} parent=1 // pred_check
      _
    $region3: #{tpu_custom_call.1} parent=1 // pred_check_branch
      %17 = sbr.rel (0) target = $region5
    $region4: #{tpu_custom_call.1} parent=1 // pred_region
      %s19 = ssub.s32 128, 128
      %20 = vsyncadd [#allocation3], %s19
      %s22 = sshll.u32 [#allocation2], 4
      %s23 = int_to_ptr.vmem [resolvable:$true] %s22
      %25 = dma.hbm_to_vmem [thread:$0]  %s0, 128, %s23, [#allocation3]
    $region5: #{tpu_custom_call.1} parent=1 // pred_fallthru
      _
    // Predicated region
    $region6: #{tpu_custom_call.1} parent=1 // pred_check
      _
    $region7: #{tpu_custom_call.1} parent=1 // pred_check_branch
      %27 = sbr.rel (0) target = $region9
    $region8: #{tpu_custom_call.1} parent=1 // pred_region
      %s29 = ssub.s32 2048, 2048
      %30 = vsyncadd [#allocation6], %s29
      %s31 = sshll.u32 [#allocation5], 4
      %s32 = int_to_ptr.vmem [resolvable:$true] %s31
      %37 = dma.hbm_to_vmem [thread:$0]  %s1, 2048, %s32, [#allocation6], 128, 128, 8
    $region9: #{tpu_custom_call.1} parent=1 // pred_fallthru
      _
    // Predicated region
    $region10: #{tpu_custom_call.1} parent=1 // pred_check
      _
    $region11: #{tpu_custom_call.1} parent=1 // pred_check_branch
      %39 = sbr.rel (0) target = $region13
    $region12: #{tpu_custom_call.1} parent=1 // pred_region
      _
    $region13: #{tpu_custom_call.1} parent=1 // pred_fallthru
      _
    // Predicated region
    $region14: #{tpu_custom_call.1} parent=1 // pred_check
      _
    $region15: #{tpu_custom_call.1} parent=1 // pred_check_branch
      %41 = sbr.rel (0) target = $region17
    $region16: #{tpu_custom_call.1} parent=1 // pred_region
      %s43 = ssub.s32 2048, 2048
      %44 = vsyncadd [#allocation6], %s43
      %s45 = sshll.u32 [#allocation7], 4
      %s46 = int_to_ptr.vmem [resolvable:$true] %s45
      %51 = dma.hbm_to_vmem [thread:$0]  %s3, 2048, %s46, [#allocation6], 128, 128, 8
    $region17: #{tpu_custom_call.1} parent=1 // pred_fallthru
      _
    // Predicated region
    $region18: #{tpu_custom_call.1} parent=1 // pred_check
      _
    $region19: #{tpu_custom_call.1} parent=1 // pred_check_branch
      %53 = sbr.rel (0) target = $region21
    $region20: #{tpu_custom_call.1} parent=1 // pred_region
      _
    $region21: #{tpu_custom_call.1} parent=1 // pred_fallthru
      _
    // Predicated region
    $region22: #{tpu_custom_call.1} parent=1 // pred_check
      _
    $region23: #{tpu_custom_call.1} parent=1 // pred_check_branch
      %55 = sbr.rel (0) target = $region25
    $region24: #{tpu_custom_call.1} parent=1 // pred_region
      %s57 = ssub.s32 2048, 2048
      %58 = vsyncadd [#allocation9], %s57
      %s59 = sshll.u32 [#allocation8], 4
      %s60 = int_to_ptr.vmem [resolvable:$true] %s59
      %65 = dma.hbm_to_vmem [thread:$0]  %s5, 2048, %s60, [#allocation9], 128, 128, 8
    $region25: #{tpu_custom_call.1} parent=1 // pred_fallthru
      _
    // Predicated region
    $region26: #{tpu_custom_call.1} parent=1 // pred_check
      _
    $region27: #{tpu_custom_call.1} parent=1 // pred_check_branch
      %67 = sbr.rel (0) target = $region29
    $region28: #{tpu_custom_call.1} parent=1 // pred_region
      _
    $region29: #{tpu_custom_call.1} parent=1 // pred_fallthru
      _
    // Predicated region
    $region30: #{tpu_custom_call.1} parent=1 // pred_check
      _
    $region31: #{tpu_custom_call.1} parent=1 // pred_check_branch
      %69 = sbr.rel (0) target = $region33
    $region32: #{tpu_custom_call.1} parent=1 // pred_region
      %70 = dma.done [#allocation3], 128
    $region33: #{tpu_custom_call.1} parent=1 // pred_fallthru
      _
    // Predicated region
    $region34: #{tpu_custom_call.1} parent=1 // pred_check
      _
    $region35: #{tpu_custom_call.1} parent=1 // pred_check_branch
      %72 = sbr.rel (0) target = $region37
    $region36: #{tpu_custom_call.1} parent=1 // pred_region
      %73 = dma.done [#allocation6], 2048
    $region37: #{tpu_custom_call.1} parent=1 // pred_fallthru
      _
    // Predicated region
    $region38: #{tpu_custom_call.1} parent=1 // pred_check
      _
    $region39: #{tpu_custom_call.1} parent=1 // pred_check_branch
      %75 = sbr.rel (0) target = $region41
    $region40: #{tpu_custom_call.1} parent=1 // pred_region
      %76 = dma.done [#allocation6], 2048
    $region41: #{tpu_custom_call.1} parent=1 // pred_fallthru
      _
    // Predicated region
    $region42: #{tpu_custom_call.1} parent=1 // pred_check
      _
    $region43: #{tpu_custom_call.1} parent=1 // pred_check_branch
      %78 = sbr.rel (0) target = $region45
    $region44: #{tpu_custom_call.1} parent=1 // pred_region
      %79 = dma.done [#allocation9], 2048
    $region45: #{tpu_custom_call.1} parent=1 // pred_fallthru
      _
    %v80 = vld [vmem:[#allocation2] sm:$0xff]
    %v81 = vld [vmem:[#allocation5] sm:$0xff]
    %v82 = vld [vmem:[#allocation5 + $0x8] sm:$0xff]
    %v83 = vld [vmem:[#allocation5 + $0x10] sm:$0xff]
    %v84 = vld [vmem:[#allocation5 + $0x18] sm:$0xff]
    %v85 = vld [vmem:[#allocation5 + $0x20] sm:$0xff]
    %v86 = vld [vmem:[#allocation5 + $0x28] sm:$0xff]
    %v87 = vld [vmem:[#allocation5 + $0x30] sm:$0xff]
    %v88 = vld [vmem:[#allocation5 + $0x38] sm:$0xff]
    %v89 = vld [vmem:[#allocation5 + $0x40] sm:$0xff]
    %v90 = vld [vmem:[#allocation5 + $0x48] sm:$0xff]
    %v91 = vld [vmem:[#allocation5 + $0x50] sm:$0xff]
    %v92 = vld [vmem:[#allocation5 + $0x58] sm:$0xff]
    %v93 = vld [vmem:[#allocation5 + $0x60] sm:$0xff]
    %v94 = vld [vmem:[#allocation5 + $0x68] sm:$0xff]
    %v95 = vld [vmem:[#allocation5 + $0x70] sm:$0xff]
    %v96 = vld [vmem:[#allocation5 + $0x78] sm:$0xff]
    %v97 = vld [vmem:[%s2] sm:$0x1]
    %v99 = vlaneseq
    %v100 = vshrl.u32 %v99, 7
    %v101 = vsub.s32 0, %v100
    %v102 = vrot.slane %v97, %v101
    %104 = vmatprep.subr.mxu0 0.0
    %105 = vmatpush1.msra.mxu0 %v96
    %106 = vmatprep.subr.mxu0 0.0
    %107 = vmatpush1.msra.mxu0 %v95
    %108 = vmatprep.subr.mxu0 0.0
    %109 = vmatpush1.msra.mxu0 %v94
    %110 = vmatprep.subr.mxu0 0.0
    %111 = vmatpush1.msra.mxu0 %v93
    %112 = vmatprep.subr.mxu0 0.0
    %113 = vmatpush1.msra.mxu0 %v92
    %114 = vmatprep.subr.mxu0 0.0
    %115 = vmatpush1.msra.mxu0 %v91
    %116 = vmatprep.subr.mxu0 0.0
    %117 = vmatpush1.msra.mxu0 %v90
    %118 = vmatprep.subr.mxu0 0.0
    %119 = vmatpush1.msra.mxu0 %v89
    %120 = vmatprep.subr.mxu0 0.0
    %121 = vmatpush1.msra.mxu0 %v88
    %122 = vmatprep.subr.mxu0 0.0
    %123 = vmatpush1.msra.mxu0 %v87
    %124 = vmatprep.subr.mxu0 0.0
    %125 = vmatpush1.msra.mxu0 %v86
    %126 = vmatprep.subr.mxu0 0.0
    %127 = vmatpush1.msra.mxu0 %v85
    %128 = vmatprep.subr.mxu0 0.0
    %129 = vmatpush1.msra.mxu0 %v84
    %130 = vmatprep.subr.mxu0 0.0
    %131 = vmatpush1.msra.mxu0 %v83
    %132 = vmatprep.subr.mxu0 0.0
    %133 = vmatpush1.msra.mxu0 %v82
    %134 = vmatprep.subr.mxu0 0.0
    %135 = vmatpush1.msra.mxu0 %v81
    %136 = vmatprep.subr.mxu0 0.0
    %137 = vmatpush2.msra.mxu0 0.0
    %138 = vmatprep.subr.mxu0 0.0
    %139 = vmatpush2.msra.mxu0 0.0
    %140 = vmatprep.subr.mxu0 0.0
    %141 = vmatpush2.msra.mxu0 0.0
    %142 = vmatprep.subr.mxu0 0.0
    %143 = vmatpush2.msra.mxu0 0.0
    %144 = vmatprep.subr.mxu0 0.0
    %145 = vmatpush2.msra.mxu0 0.0
    %146 = vmatprep.subr.mxu0 0.0
    %147 = vmatpush2.msra.mxu0 0.0
    %148 = vmatprep.subr.mxu0 0.0
    %149 = vmatpush2.msra.mxu0 0.0
    %150 = vmatprep.subr.mxu0 0.0
    %151 = vmatpush2.msra.mxu0 0.0
    %152 = vmatprep.subr.mxu0 0.0
    %153 = vmatpush2.msra.mxu0 0.0
    %154 = vmatprep.subr.mxu0 0.0
    %155 = vmatpush2.msra.mxu0 0.0
    %156 = vmatprep.subr.mxu0 0.0
    %157 = vmatpush2.msra.mxu0 0.0
    %158 = vmatprep.subr.mxu0 0.0
    %159 = vmatpush2.msra.mxu0 0.0
    %160 = vmatprep.subr.mxu0 0.0
    %161 = vmatpush2.msra.mxu0 0.0
    %162 = vmatprep.subr.mxu0 0.0
    %163 = vmatpush2.msra.mxu0 0.0
    %164 = vmatprep.subr.mxu0 0.0
    %165 = vmatpush2.msra.mxu0 0.0
    %166 = vmatprep.subr.mxu0 0.0
    %167 = vmatpush2.msra.mxu0 0.0
    %168 = vmatprep.mubr.f32.mxu0 0.0
    %169 = vmatmul.mubr.f32.gmra.mxu0 %v80
    %v170 = vpop.f32.mrf.mxu0
    %v171 = vadd.f32 %v102, %v170
    %v172 = vpop.f32.mrf.mxu0
    %173 = vdwg.mxu0
    %v174 = vmax.f32 %v171, 0.0
    %v175 = vld [vmem:[#allocation7] sm:$0xff]
    %v176 = vld [vmem:[#allocation7 + $0x8] sm:$0xff]
    %v177 = vld [vmem:[#allocation7 + $0x10] sm:$0xff]
    %v178 = vld [vmem:[#allocation7 + $0x18] sm:$0xff]
    %v179 = vld [vmem:[#allocation7 + $0x20] sm:$0xff]
    %v180 = vld [vmem:[#allocation7 + $0x28] sm:$0xff]
    %v181 = vld [vmem:[#allocation7 + $0x30] sm:$0xff]
    %v182 = vld [vmem:[#allocation7 + $0x38] sm:$0xff]
    %v183 = vld [vmem:[#allocation7 + $0x40] sm:$0xff]
    %v184 = vld [vmem:[#allocation7 + $0x48] sm:$0xff]
    %v185 = vld [vmem:[#allocation7 + $0x50] sm:$0xff]
    %v186 = vld [vmem:[#allocation7 + $0x58] sm:$0xff]
    %v187 = vld [vmem:[#allocation7 + $0x60] sm:$0xff]
    %v188 = vld [vmem:[#allocation7 + $0x68] sm:$0xff]
    %v189 = vld [vmem:[#allocation7 + $0x70] sm:$0xff]
    %v190 = vld [vmem:[#allocation7 + $0x78] sm:$0xff]
    %v191 = vld [vmem:[%s4] sm:$0x1]
    %v193 = vlaneseq
    %v194 = vshrl.u32 %v193, 7
    %v195 = vsub.s32 0, %v194
    %v196 = vrot.slane %v191, %v195
    %198 = vmatprep.subr.mxu0 0.0
    %199 = vmatpush1.msra.mxu0 %v190
    %200 = vmatprep.subr.mxu0 0.0
    %201 = vmatpush1.msra.mxu0 %v189
    %202 = vmatprep.subr.mxu0 0.0
    %203 = vmatpush1.msra.mxu0 %v188
    %204 = vmatprep.subr.mxu0 0.0
    %205 = vmatpush1.msra.mxu0 %v187
    %206 = vmatprep.subr.mxu0 0.0
    %207 = vmatpush1.msra.mxu0 %v186
    %208 = vmatprep.subr.mxu0 0.0
    %209 = vmatpush1.msra.mxu0 %v185
    %210 = vmatprep.subr.mxu0 0.0
    %211 = vmatpush1.msra.mxu0 %v184
    %212 = vmatprep.subr.mxu0 0.0
    %213 = vmatpush1.msra.mxu0 %v183
    %214 = vmatprep.subr.mxu0 0.0
    %215 = vmatpush1.msra.mxu0 %v182
    %216 = vmatprep.subr.mxu0 0.0
    %217 = vmatpush1.msra.mxu0 %v181
    %218 = vmatprep.subr.mxu0 0.0
    %219 = vmatpush1.msra.mxu0 %v180
    %220 = vmatprep.subr.mxu0 0.0
    %221 = vmatpush1.msra.mxu0 %v179
    %222 = vmatprep.subr.mxu0 0.0
    %223 = vmatpush1.msra.mxu0 %v178
    %224 = vmatprep.subr.mxu0 0.0
    %225 = vmatpush1.msra.mxu0 %v177
    %226 = vmatprep.subr.mxu0 0.0
    %227 = vmatpush1.msra.mxu0 %v176
    %228 = vmatprep.subr.mxu0 0.0
    %229 = vmatpush1.msra.mxu0 %v175
    %230 = vmatprep.subr.mxu0 0.0
    %231 = vmatpush2.msra.mxu0 0.0
    %232 = vmatprep.subr.mxu0 0.0
    %233 = vmatpush2.msra.mxu0 0.0
    %234 = vmatprep.subr.mxu0 0.0
    %235 = vmatpush2.msra.mxu0 0.0
    %236 = vmatprep.subr.mxu0 0.0
    %237 = vmatpush2.msra.mxu0 0.0
    %238 = vmatprep.subr.mxu0 0.0
    %239 = vmatpush2.msra.mxu0 0.0
    %240 = vmatprep.subr.mxu0 0.0
    %241 = vmatpush2.msra.mxu0 0.0
    %242 = vmatprep.subr.mxu0 0.0
    %243 = vmatpush2.msra.mxu0 0.0
    %244 = vmatprep.subr.mxu0 0.0
    %245 = vmatpush2.msra.mxu0 0.0
    %246 = vmatprep.subr.mxu0 0.0
    %247 = vmatpush2.msra.mxu0 0.0
    %248 = vmatprep.subr.mxu0 0.0
    %249 = vmatpush2.msra.mxu0 0.0
    %250 = vmatprep.subr.mxu0 0.0
    %251 = vmatpush2.msra.mxu0 0.0
    %252 = vmatprep.subr.mxu0 0.0
    %253 = vmatpush2.msra.mxu0 0.0
    %254 = vmatprep.subr.mxu0 0.0
    %255 = vmatpush2.msra.mxu0 0.0
    %256 = vmatprep.subr.mxu0 0.0
    %257 = vmatpush2.msra.mxu0 0.0
    %258 = vmatprep.subr.mxu0 0.0
    %259 = vmatpush2.msra.mxu0 0.0
    %260 = vmatprep.subr.mxu0 0.0
    %261 = vmatpush2.msra.mxu0 0.0
    %262 = vmatprep.mubr.f32.mxu0 0.0
    %263 = vmatmul.mubr.f32.gmra.mxu0 %v174
    %v264 = vpop.f32.mrf.mxu0
    %v265 = vadd.f32 %v196, %v264
    %v266 = vpop.f32.mrf.mxu0
    %267 = vdwg.mxu0
    %v268 = vmax.f32 %v265, 0.0
    %v269 = vld [vmem:[#allocation8] sm:$0xff]
    %v270 = vld [vmem:[#allocation8 + $0x8] sm:$0xff]
    %v271 = vld [vmem:[#allocation8 + $0x10] sm:$0xff]
    %v272 = vld [vmem:[#allocation8 + $0x18] sm:$0xff]
    %v273 = vld [vmem:[#allocation8 + $0x20] sm:$0xff]
    %v274 = vld [vmem:[#allocation8 + $0x28] sm:$0xff]
    %v275 = vld [vmem:[#allocation8 + $0x30] sm:$0xff]
    %v276 = vld [vmem:[#allocation8 + $0x38] sm:$0xff]
    %v277 = vld [vmem:[#allocation8 + $0x40] sm:$0xff]
    %v278 = vld [vmem:[#allocation8 + $0x48] sm:$0xff]
    %v279 = vld [vmem:[#allocation8 + $0x50] sm:$0xff]
    %v280 = vld [vmem:[#allocation8 + $0x58] sm:$0xff]
    %v281 = vld [vmem:[#allocation8 + $0x60] sm:$0xff]
    %v282 = vld [vmem:[#allocation8 + $0x68] sm:$0xff]
    %v283 = vld [vmem:[#allocation8 + $0x70] sm:$0xff]
    %v284 = vld [vmem:[#allocation8 + $0x78] sm:$0xff]
    %v285 = vld [vmem:[%s6] sm:$0x1]
    %v287 = vlaneseq
    %v288 = vshrl.u32 %v287, 7
    %v289 = vsub.s32 0, %v288
    %v290 = vrot.slane %v285, %v289
    %292 = vmatprep.subr.mxu0 0.0
    %293 = vmatpush1.msra.mxu0 %v284
    %294 = vmatprep.subr.mxu0 0.0
    %295 = vmatpush1.msra.mxu0 %v283
    %296 = vmatprep.subr.mxu0 0.0
    %297 = vmatpush1.msra.mxu0 %v282
    %298 = vmatprep.subr.mxu0 0.0
    %299 = vmatpush1.msra.mxu0 %v281
    %300 = vmatprep.subr.mxu0 0.0
    %301 = vmatpush1.msra.mxu0 %v280
    %302 = vmatprep.subr.mxu0 0.0
    %303 = vmatpush1.msra.mxu0 %v279
    %304 = vmatprep.subr.mxu0 0.0
    %305 = vmatpush1.msra.mxu0 %v278
    %306 = vmatprep.subr.mxu0 0.0
    %307 = vmatpush1.msra.mxu0 %v277
    %308 = vmatprep.subr.mxu0 0.0
    %309 = vmatpush1.msra.mxu0 %v276
    %310 = vmatprep.subr.mxu0 0.0
    %311 = vmatpush1.msra.mxu0 %v275
    %312 = vmatprep.subr.mxu0 0.0
    %313 = vmatpush1.msra.mxu0 %v274
    %314 = vmatprep.subr.mxu0 0.0
    %315 = vmatpush1.msra.mxu0 %v273
    %316 = vmatprep.subr.mxu0 0.0
    %317 = vmatpush1.msra.mxu0 %v272
    %318 = vmatprep.subr.mxu0 0.0
    %319 = vmatpush1.msra.mxu0 %v271
    %320 = vmatprep.subr.mxu0 0.0
    %321 = vmatpush1.msra.mxu0 %v270
    %322 = vmatprep.subr.mxu0 0.0
    %323 = vmatpush1.msra.mxu0 %v269
    %324 = vmatprep.subr.mxu0 0.0
    %325 = vmatpush2.msra.mxu0 0.0
    %326 = vmatprep.subr.mxu0 0.0
    %327 = vmatpush2.msra.mxu0 0.0
    %328 = vmatprep.subr.mxu0 0.0
    %329 = vmatpush2.msra.mxu0 0.0
    %330 = vmatprep.subr.mxu0 0.0
    %331 = vmatpush2.msra.mxu0 0.0
    %332 = vmatprep.subr.mxu0 0.0
    %333 = vmatpush2.msra.mxu0 0.0
    %334 = vmatprep.subr.mxu0 0.0
    %335 = vmatpush2.msra.mxu0 0.0
    %336 = vmatprep.subr.mxu0 0.0
    %337 = vmatpush2.msra.mxu0 0.0
    %338 = vmatprep.subr.mxu0 0.0
    %339 = vmatpush2.msra.mxu0 0.0
    %340 = vmatprep.subr.mxu0 0.0
    %341 = vmatpush2.msra.mxu0 0.0
    %342 = vmatprep.subr.mxu0 0.0
    %343 = vmatpush2.msra.mxu0 0.0
    %344 = vmatprep.subr.mxu0 0.0
    %345 = vmatpush2.msra.mxu0 0.0
    %346 = vmatprep.subr.mxu0 0.0
    %347 = vmatpush2.msra.mxu0 0.0
    %348 = vmatprep.subr.mxu0 0.0
    %349 = vmatpush2.msra.mxu0 0.0
    %350 = vmatprep.subr.mxu0 0.0
    %351 = vmatpush2.msra.mxu0 0.0
    %352 = vmatprep.subr.mxu0 0.0
    %353 = vmatpush2.msra.mxu0 0.0
    %354 = vmatprep.subr.mxu0 0.0
    %355 = vmatpush2.msra.mxu0 0.0
    %356 = vmatprep.mubr.f32.mxu0 0.0
    %357 = vmatmul.mubr.f32.gmra.mxu0 %v268
    %v358 = vpop.f32.mrf.mxu0
    %v359 = vadd.f32 %v290, %v358
    %v360 = vpop.f32.mrf.mxu0
    %361 = vdwg.mxu0
    %v362 = vmax.f32 %v359, 0.0
    %363 = vst [vmem:[#allocation10] sm:$0xff] %v362
    // Predicated region
    $region46: #{tpu_custom_call.1} parent=1 // pred_check
      _
    $region47: #{tpu_custom_call.1} parent=1 // pred_check_branch
      %365 = sbr.rel (0) target = $region49
    $region48: #{tpu_custom_call.1} parent=1 // pred_region
      %s367 = ssub.s32 128, 128
      %368 = vsyncadd [#allocation4], %s367
      %s370 = sshll.u32 [#allocation10], 4
      %s371 = int_to_ptr.vmem [resolvable:$true] %s370
      %373 = dma.vmem_to_hbm [thread:$0]  %s371, 128, %s7, [#allocation4]
    $region49: #{tpu_custom_call.1} parent=1 // pred_fallthru
      _
    // Predicated region
    $region50: #{tpu_custom_call.1} parent=1 // pred_check
      _
    $region51: #{tpu_custom_call.1} parent=1 // pred_check_branch
      %375 = sbr.rel (0) target = $region53
    $region52: #{tpu_custom_call.1} parent=1 // pred_region
      %376 = dma.done [#allocation4], 128
    $region53: #{tpu_custom_call.1} parent=1 // pred_fallthru
      _
    %377 = vsyncpa [#allocation3], 1
    %378 = vsyncpa [#allocation6], 1
    %379 = vsyncpa [#allocation9], 1
    %380 = vsyncpa [#allocation4], 1

// kernel: tpu_custom_call.1
$region0: #{tpu_custom_call.1}
  #allocation0 [shape = 'u32[]', space=smem, size = 0x4, offset = 0x4, fixed_abs, tag = 'smem constant byte address 0x4 - core index']
  #allocation1 [shape = 'u32[144,128]{1,0:T(1,128)}', space=vmem, size = 0x12000, scoped, tag = 'internal scratch']
  %s0 = inlined_call_operand.hbm [shape: f32[8,128], index: 0, kind: input, shape index: {}]
  %s1 = inlined_call_operand.hbm [shape: f32[128,128], index: 1, kind: input, shape index: {}]
  %s2 = inlined_call_operand.vmem [shape: f32[1,128], index: 2, kind: input, shape index: {}]
  %s3 = inlined_call_operand.hbm [shape: f32[128,128], index: 3, kind: input, shape index: {}]
  %s4 = inlined_call_operand.vmem [shape: f32[1,128], index: 4, kind: input, shape index: {}]
  %s5 = inlined_call_operand.hbm [shape: f32[128,128], index: 5, kind: input, shape index: {}]
  %s6 = inlined_call_operand.vmem [shape: f32[1,128], index: 6, kind: input, shape index: {}]
  %s7 = inlined_call_operand.hbm [shape: f32[8,128], index: 7, kind: output, shape index: {}]
  %s8 = sld [smem:[#allocation0]]
  $region54: #{tpu_custom_call.1} parent=0
    _
  %s10 = ssub.s32 1, %s8
  %s11 = scalar_select 0, %s10, %s8
  $region1: #{tpu_custom_call.1} parent=0
    #allocation2 [shape = 'u8[4096]{0}', space=vmem, size = 0x1000, scoped, tag = 'input window, operand 0, single buffered']
    #allocation3 [shape = 's32[1]{0}', space=sflag, size = 0x4, scoped, tag = 'scoped memory for tpu_custom_call.1']
    #allocation4 [shape = 's32[1]{0}', space=sflag, size = 0x4, scoped, tag = 'scoped memory for tpu_custom_call.1']
    #allocation5 [shape = 'u8[65536]{0}', space=vmem, size = 0x10000, scoped, tag = 'input window, operand 1, single buffered']
    #allocation6 [shape = 's32[1]{0}', space=sflag, size = 0x4, scoped, tag = 'scoped memory for tpu_custom_call.1']
    #allocation7 [shape = 'u8[65536]{0}', space=vmem, size = 0x10000, scoped, tag = 'input window, operand 3, single buffered']
    #allocation8 [shape = 'u8[65536]{0}', space=vmem, size = 0x10000, scoped, tag = 'input window, operand 5, single buffered']
    #allocation9 [shape = 's32[1]{0}', space=sflag, size = 0x4, scoped, tag = 'scoped memory for tpu_custom_call.1']
    #allocation10 [shape = 'u8[4096]{0}', space=vmem, size = 0x1000, scoped, tag = 'output window, operand 0, single buffered']
    %12 = vsyncpa [#allocation3], 0
    %13 = vsyncpa [#allocation6], 0
    %14 = vsyncpa [#allocation9], 0
    %15 = vsyncpa [#allocation4], 0
    // Predicated region
    $region2: #{tpu_custom_call.1} parent=1 // pred_check
      _
    $region3: #{tpu_custom_call.1} parent=1 // pred_check_branch
      %17 = sbr.rel (0) target = $region5
    $region4: #{tpu_custom_call.1} parent=1 // pred_region
      %s19 = ssub.s32 128, 128
      %20 = vsyncadd [#allocation3], %s19
      %s22 = sshll.u32 [#allocation2], 4
      %s23 = int_to_ptr.vmem [resolvable:$true] %s22
      %25 = dma.hbm_to_vmem [thread:$0]  %s0, 128, %s23, [#allocation3]
    $region5: #{tpu_custom_call.1} parent=1 // pred_fallthru
      _
    // Predicated region
    $region6: #{tpu_custom_call.1} parent=1 // pred_check
      _
    $region7: #{tpu_custom_call.1} parent=1 // pred_check_branch
      %27 = sbr.rel (0) target = $region9
    $region8: #{tpu_custom_call.1} parent=1 // pred_region
      %s29 = ssub.s32 2048, 2048
      %30 = vsyncadd [#allocation6], %s29
      %s31 = sshll.u32 [#allocation5], 4
      %s32 = int_to_ptr.vmem [resolvable:$true] %s31
      %37 = dma.hbm_to_vmem [thread:$0]  %s1, 2048, %s32, [#allocation6], 128, 128, 8
    $region9: #{tpu_custom_call.1} parent=1 // pred_fallthru
      _
    // Predicated region
    $region10: #{tpu_custom_call.1} parent=1 // pred_check
      _
    $region11: #{tpu_custom_call.1} parent=1 // pred_check_branch
      %39 = sbr.rel (0) target = $region13
    $region12: #{tpu_custom_call.1} parent=1 // pred_region
      _
    $region13: #{tpu_custom_call.1} parent=1 // pred_fallthru
      _
    // Predicated region
    $region14: #{tpu_custom_call.1} parent=1 // pred_check
      _
    $region15: #{tpu_custom_call.1} parent=1 // pred_check_branch
      %41 = sbr.rel (0) target = $region17
    $region16: #{tpu_custom_call.1} parent=1 // pred_region
      %s43 = ssub.s32 2048, 2048
      %44 = vsyncadd [#allocation6], %s43
      %s45 = sshll.u32 [#allocation7], 4
      %s46 = int_to_ptr.vmem [resolvable:$true] %s45
      %51 = dma.hbm_to_vmem [thread:$0]  %s3, 2048, %s46, [#allocation6], 128, 128, 8
    $region17: #{tpu_custom_call.1} parent=1 // pred_fallthru
      _
    // Predicated region
    $region18: #{tpu_custom_call.1} parent=1 // pred_check
      _
    $region19: #{tpu_custom_call.1} parent=1 // pred_check_branch
      %53 = sbr.rel (0) target = $region21
    $region20: #{tpu_custom_call.1} parent=1 // pred_region
      _
    $region21: #{tpu_custom_call.1} parent=1 // pred_fallthru
      _
    // Predicated region
    $region22: #{tpu_custom_call.1} parent=1 // pred_check
      _
    $region23: #{tpu_custom_call.1} parent=1 // pred_check_branch
      %55 = sbr.rel (0) target = $region25
    $region24: #{tpu_custom_call.1} parent=1 // pred_region
      %s57 = ssub.s32 2048, 2048
      %58 = vsyncadd [#allocation9], %s57
      %s59 = sshll.u32 [#allocation8], 4
      %s60 = int_to_ptr.vmem [resolvable:$true] %s59
      %65 = dma.hbm_to_vmem [thread:$0]  %s5, 2048, %s60, [#allocation9], 128, 128, 8
    $region25: #{tpu_custom_call.1} parent=1 // pred_fallthru
      _
    // Predicated region
    $region26: #{tpu_custom_call.1} parent=1 // pred_check
      _
    $region27: #{tpu_custom_call.1} parent=1 // pred_check_branch
      %67 = sbr.rel (0) target = $region29
    $region28: #{tpu_custom_call.1} parent=1 // pred_region
      _
    $region29: #{tpu_custom_call.1} parent=1 // pred_fallthru
      _
    // Predicated region
    $region30: #{tpu_custom_call.1} parent=1 // pred_check
      _
    $region31: #{tpu_custom_call.1} parent=1 // pred_check_branch
      %69 = sbr.rel (0) target = $region33
    $region32: #{tpu_custom_call.1} parent=1 // pred_region
      %70 = dma.done [#allocation3], 128
    $region33: #{tpu_custom_call.1} parent=1 // pred_fallthru
      _
    // Predicated region
    $region34: #{tpu_custom_call.1} parent=1 // pred_check
      _
    $region35: #{tpu_custom_call.1} parent=1 // pred_check_branch
      %72 = sbr.rel (0) target = $region37
    $region36: #{tpu_custom_call.1} parent=1 // pred_region
      %73 = dma.done [#allocation6], 2048
    $region37: #{tpu_custom_call.1} parent=1 // pred_fallthru
      _
    // Predicated region
    $region38: #{tpu_custom_call.1} parent=1 // pred_check
      _
    $region39: #{tpu_custom_call.1} parent=1 // pred_check_branch
      %75 = sbr.rel (0) target = $region41
    $region40: #{tpu_custom_call.1} parent=1 // pred_region
      %76 = dma.done [#allocation6], 2048
    $region41: #{tpu_custom_call.1} parent=1 // pred_fallthru
      _
    // Predicated region
    $region42: #{tpu_custom_call.1} parent=1 // pred_check
      _
    $region43: #{tpu_custom_call.1} parent=1 // pred_check_branch
      %78 = sbr.rel (0) target = $region45
    $region44: #{tpu_custom_call.1} parent=1 // pred_region
      %79 = dma.done [#allocation9], 2048
    $region45: #{tpu_custom_call.1} parent=1 // pred_fallthru
      _
    %v80 = vld [vmem:[#allocation2] sm:$0xff]
    %v81 = vld [vmem:[#allocation5] sm:$0xff]
    %v82 = vld [vmem:[#allocation5 + $0x8] sm:$0xff]
    %v83 = vld [vmem:[#allocation5 + $0x10] sm:$0xff]
    %v84 = vld [vmem:[#allocation5 + $0x18] sm:$0xff]
    %v85 = vld [vmem:[#allocation5 + $0x20] sm:$0xff]
    %v86 = vld [vmem:[#allocation5 + $0x28] sm:$0xff]
    %v87 = vld [vmem:[#allocation5 + $0x30] sm:$0xff]
    %v88 = vld [vmem:[#allocation5 + $0x38] sm:$0xff]
    %v89 = vld [vmem:[#allocation5 + $0x40] sm:$0xff]
    %v90 = vld [vmem:[#allocation5 + $0x48] sm:$0xff]
    %v91 = vld [vmem:[#allocation5 + $0x50] sm:$0xff]
    %v92 = vld [vmem:[#allocation5 + $0x58] sm:$0xff]
    %v93 = vld [vmem:[#allocation5 + $0x60] sm:$0xff]
    %v94 = vld [vmem:[#allocation5 + $0x68] sm:$0xff]
    %v95 = vld [vmem:[#allocation5 + $0x70] sm:$0xff]
    %v96 = vld [vmem:[#allocation5 + $0x78] sm:$0xff]
    %v97 = vld [vmem:[%s2] sm:$0x1]
    %v99 = vlaneseq
    %v100 = vshrl.u32 %v99, 7
    %v101 = vsub.s32 0, %v100
    %v102 = vrot.slane %v97, %v101
    %104 = vmatprep.subr.mxu0 0.0
    %105 = vmatpush1.msra.mxu0 %v96
    %106 = vmatprep.subr.mxu0 0.0
    %107 = vmatpush1.msra.mxu0 %v95
    %108 = vmatprep.subr.mxu0 0.0
    %109 = vmatpush1.msra.mxu0 %v94
    %110 = vmatprep.subr.mxu0 0.0
    %111 = vmatpush1.msra.mxu0 %v93
    %112 = vmatprep.subr.mxu0 0.0
    %113 = vmatpush1.msra.mxu0 %v92
    %114 = vmatprep.subr.mxu0 0.0
    %115 = vmatpush1.msra.mxu0 %v91
    %116 = vmatprep.subr.mxu0 0.0
    %117 = vmatpush1.msra.mxu0 %v90
    %118 = vmatprep.subr.mxu0 0.0
    %119 = vmatpush1.msra.mxu0 %v89
    %120 = vmatprep.subr.mxu0 0.0
    %121 = vmatpush1.msra.mxu0 %v88
    %122 = vmatprep.subr.mxu0 0.0
    %123 = vmatpush1.msra.mxu0 %v87
    %124 = vmatprep.subr.mxu0 0.0
    %125 = vmatpush1.msra.mxu0 %v86
    %126 = vmatprep.subr.mxu0 0.0
    %127 = vmatpush1.msra.mxu0 %v85
    %128 = vmatprep.subr.mxu0 0.0
    %129 = vmatpush1.msra.mxu0 %v84
    %130 = vmatprep.subr.mxu0 0.0
    %131 = vmatpush1.msra.mxu0 %v83
    %132 = vmatprep.subr.mxu0 0.0
    %133 = vmatpush1.msra.mxu0 %v82
    %134 = vmatprep.subr.mxu0 0.0
    %135 = vmatpush1.msra.mxu0 %v81
    %136 = vmatprep.subr.mxu0 0.0
    %137 = vmatpush2.msra.mxu0 0.0
    %138 = vmatprep.subr.mxu0 0.0
    %139 = vmatpush2.msra.mxu0 0.0
    %140 = vmatprep.subr.mxu0 0.0
    %141 = vmatpush2.msra.mxu0 0.0
    %142 = vmatprep.subr.mxu0 0.0
    %143 = vmatpush2.msra.mxu0 0.0
    %144 = vmatprep.subr.mxu0 0.0
    %145 = vmatpush2.msra.mxu0 0.0
    %146 = vmatprep.subr.mxu0 0.0
    %147 = vmatpush2.msra.mxu0 0.0
    %148 = vmatprep.subr.mxu0 0.0
    %149 = vmatpush2.msra.mxu0 0.0
    %150 = vmatprep.subr.mxu0 0.0
    %151 = vmatpush2.msra.mxu0 0.0
    %152 = vmatprep.subr.mxu0 0.0
    %153 = vmatpush2.msra.mxu0 0.0
    %154 = vmatprep.subr.mxu0 0.0
    %155 = vmatpush2.msra.mxu0 0.0
    %156 = vmatprep.subr.mxu0 0.0
    %157 = vmatpush2.msra.mxu0 0.0
    %158 = vmatprep.subr.mxu0 0.0
    %159 = vmatpush2.msra.mxu0 0.0
    %160 = vmatprep.subr.mxu0 0.0
    %161 = vmatpush2.msra.mxu0 0.0
    %162 = vmatprep.subr.mxu0 0.0
    %163 = vmatpush2.msra.mxu0 0.0
    %164 = vmatprep.subr.mxu0 0.0
    %165 = vmatpush2.msra.mxu0 0.0
    %166 = vmatprep.subr.mxu0 0.0
    %167 = vmatpush2.msra.mxu0 0.0
    %168 = vmatprep.mubr.f32.mxu0 0.0
    %169 = vmatmul.mubr.f32.gmra.mxu0 %v80
    %v170 = vpop.f32.mrf.mxu0
    %v171 = vadd.f32 %v102, %v170
    %v172 = vpop.f32.mrf.mxu0
    %173 = vdwg.mxu0
    %v174 = vmax.f32 %v171, 0.0
    %v175 = vld [vmem:[#allocation7] sm:$0xff]
    %v176 = vld [vmem:[#allocation7 + $0x8] sm:$0xff]
    %v177 = vld [vmem:[#allocation7 + $0x10] sm:$0xff]
    %v178 = vld [vmem:[#allocation7 + $0x18] sm:$0xff]
    %v179 = vld [vmem:[#allocation7 + $0x20] sm:$0xff]
    %v180 = vld [vmem:[#allocation7 + $0x28] sm:$0xff]
    %v181 = vld [vmem:[#allocation7 + $0x30] sm:$0xff]
    %v182 = vld [vmem:[#allocation7 + $0x38] sm:$0xff]
    %v183 = vld [vmem:[#allocation7 + $0x40] sm:$0xff]
    %v184 = vld [vmem:[#allocation7 + $0x48] sm:$0xff]
    %v185 = vld [vmem:[#allocation7 + $0x50] sm:$0xff]
    %v186 = vld [vmem:[#allocation7 + $0x58] sm:$0xff]
    %v187 = vld [vmem:[#allocation7 + $0x60] sm:$0xff]
    %v188 = vld [vmem:[#allocation7 + $0x68] sm:$0xff]
    %v189 = vld [vmem:[#allocation7 + $0x70] sm:$0xff]
    %v190 = vld [vmem:[#allocation7 + $0x78] sm:$0xff]
    %v191 = vld [vmem:[%s4] sm:$0x1]
    %v193 = vlaneseq
    %v194 = vshrl.u32 %v193, 7
    %v195 = vsub.s32 0, %v194
    %v196 = vrot.slane %v191, %v195
    %198 = vmatprep.subr.mxu0 0.0
    %199 = vmatpush1.msra.mxu0 %v190
    %200 = vmatprep.subr.mxu0 0.0
    %201 = vmatpush1.msra.mxu0 %v189
    %202 = vmatprep.subr.mxu0 0.0
    %203 = vmatpush1.msra.mxu0 %v188
    %204 = vmatprep.subr.mxu0 0.0
    %205 = vmatpush1.msra.mxu0 %v187
    %206 = vmatprep.subr.mxu0 0.0
    %207 = vmatpush1.msra.mxu0 %v186
    %208 = vmatprep.subr.mxu0 0.0
    %209 = vmatpush1.msra.mxu0 %v185
    %210 = vmatprep.subr.mxu0 0.0
    %211 = vmatpush1.msra.mxu0 %v184
    %212 = vmatprep.subr.mxu0 0.0
    %213 = vmatpush1.msra.mxu0 %v183
    %214 = vmatprep.subr.mxu0 0.0
    %215 = vmatpush1.msra.mxu0 %v182
    %216 = vmatprep.subr.mxu0 0.0
    %217 = vmatpush1.msra.mxu0 %v181
    %218 = vmatprep.subr.mxu0 0.0
    %219 = vmatpush1.msra.mxu0 %v180
    %220 = vmatprep.subr.mxu0 0.0
    %221 = vmatpush1.msra.mxu0 %v179
    %222 = vmatprep.subr.mxu0 0.0
    %223 = vmatpush1.msra.mxu0 %v178
    %224 = vmatprep.subr.mxu0 0.0
    %225 = vmatpush1.msra.mxu0 %v177
    %226 = vmatprep.subr.mxu0 0.0
    %227 = vmatpush1.msra.mxu0 %v176
    %228 = vmatprep.subr.mxu0 0.0
    %229 = vmatpush1.msra.mxu0 %v175
    %230 = vmatprep.subr.mxu0 0.0
    %231 = vmatpush2.msra.mxu0 0.0
    %232 = vmatprep.subr.mxu0 0.0
    %233 = vmatpush2.msra.mxu0 0.0
    %234 = vmatprep.subr.mxu0 0.0
    %235 = vmatpush2.msra.mxu0 0.0
    %236 = vmatprep.subr.mxu0 0.0
    %237 = vmatpush2.msra.mxu0 0.0
    %238 = vmatprep.subr.mxu0 0.0
    %239 = vmatpush2.msra.mxu0 0.0
    %240 = vmatprep.subr.mxu0 0.0
    %241 = vmatpush2.msra.mxu0 0.0
    %242 = vmatprep.subr.mxu0 0.0
    %243 = vmatpush2.msra.mxu0 0.0
    %244 = vmatprep.subr.mxu0 0.0
    %245 = vmatpush2.msra.mxu0 0.0
    %246 = vmatprep.subr.mxu0 0.0
    %247 = vmatpush2.msra.mxu0 0.0
    %248 = vmatprep.subr.mxu0 0.0
    %249 = vmatpush2.msra.mxu0 0.0
    %250 = vmatprep.subr.mxu0 0.0
    %251 = vmatpush2.msra.mxu0 0.0
    %252 = vmatprep.subr.mxu0 0.0
    %253 = vmatpush2.msra.mxu0 0.0
    %254 = vmatprep.subr.mxu0 0.0
    %255 = vmatpush2.msra.mxu0 0.0
    %256 = vmatprep.subr.mxu0 0.0
    %257 = vmatpush2.msra.mxu0 0.0
    %258 = vmatprep.subr.mxu0 0.0
    %259 = vmatpush2.msra.mxu0 0.0
    %260 = vmatprep.subr.mxu0 0.0
    %261 = vmatpush2.msra.mxu0 0.0
    %262 = vmatprep.mubr.f32.mxu0 0.0
    %263 = vmatmul.mubr.f32.gmra.mxu0 %v174
    %v264 = vpop.f32.mrf.mxu0
    %v265 = vadd.f32 %v196, %v264
    %v266 = vpop.f32.mrf.mxu0
    %267 = vdwg.mxu0
    %v268 = vmax.f32 %v265, 0.0
    %v269 = vld [vmem:[#allocation8] sm:$0xff]
    %v270 = vld [vmem:[#allocation8 + $0x8] sm:$0xff]
    %v271 = vld [vmem:[#allocation8 + $0x10] sm:$0xff]
    %v272 = vld [vmem:[#allocation8 + $0x18] sm:$0xff]
    %v273 = vld [vmem:[#allocation8 + $0x20] sm:$0xff]
    %v274 = vld [vmem:[#allocation8 + $0x28] sm:$0xff]
    %v275 = vld [vmem:[#allocation8 + $0x30] sm:$0xff]
    %v276 = vld [vmem:[#allocation8 + $0x38] sm:$0xff]
    %v277 = vld [vmem:[#allocation8 + $0x40] sm:$0xff]
    %v278 = vld [vmem:[#allocation8 + $0x48] sm:$0xff]
    %v279 = vld [vmem:[#allocation8 + $0x50] sm:$0xff]
    %v280 = vld [vmem:[#allocation8 + $0x58] sm:$0xff]
    %v281 = vld [vmem:[#allocation8 + $0x60] sm:$0xff]
    %v282 = vld [vmem:[#allocation8 + $0x68] sm:$0xff]
    %v283 = vld [vmem:[#allocation8 + $0x70] sm:$0xff]
    %v284 = vld [vmem:[#allocation8 + $0x78] sm:$0xff]
    %v285 = vld [vmem:[%s6] sm:$0x1]
    %v287 = vlaneseq
    %v288 = vshrl.u32 %v287, 7
    %v289 = vsub.s32 0, %v288
    %v290 = vrot.slane %v285, %v289
    %292 = vmatprep.subr.mxu0 0.0
    %293 = vmatpush1.msra.mxu0 %v284
    %294 = vmatprep.subr.mxu0 0.0
    %295 = vmatpush1.msra.mxu0 %v283
    %296 = vmatprep.subr.mxu0 0.0
    %297 = vmatpush1.msra.mxu0 %v282
    %298 = vmatprep.subr.mxu0 0.0
    %299 = vmatpush1.msra.mxu0 %v281
    %300 = vmatprep.subr.mxu0 0.0
    %301 = vmatpush1.msra.mxu0 %v280
    %302 = vmatprep.subr.mxu0 0.0
    %303 = vmatpush1.msra.mxu0 %v279
    %304 = vmatprep.subr.mxu0 0.0
    %305 = vmatpush1.msra.mxu0 %v278
    %306 = vmatprep.subr.mxu0 0.0
    %307 = vmatpush1.msra.mxu0 %v277
    %308 = vmatprep.subr.mxu0 0.0
    %309 = vmatpush1.msra.mxu0 %v276
    %310 = vmatprep.subr.mxu0 0.0
    %311 = vmatpush1.msra.mxu0 %v275
    %312 = vmatprep.subr.mxu0 0.0
    %313 = vmatpush1.msra.mxu0 %v274
    %314 = vmatprep.subr.mxu0 0.0
    %315 = vmatpush1.msra.mxu0 %v273
    %316 = vmatprep.subr.mxu0 0.0
    %317 = vmatpush1.msra.mxu0 %v272
    %318 = vmatprep.subr.mxu0 0.0
    %319 = vmatpush1.msra.mxu0 %v271
    %320 = vmatprep.subr.mxu0 0.0
    %321 = vmatpush1.msra.mxu0 %v270
    %322 = vmatprep.subr.mxu0 0.0
    %323 = vmatpush1.msra.mxu0 %v269
    %324 = vmatprep.subr.mxu0 0.0
    %325 = vmatpush2.msra.mxu0 0.0
    %326 = vmatprep.subr.mxu0 0.0
    %327 = vmatpush2.msra.mxu0 0.0
    %328 = vmatprep.subr.mxu0 0.0
    %329 = vmatpush2.msra.mxu0 0.0
    %330 = vmatprep.subr.mxu0 0.0
    %331 = vmatpush2.msra.mxu0 0.0
    %332 = vmatprep.subr.mxu0 0.0
    %333 = vmatpush2.msra.mxu0 0.0
    %334 = vmatprep.subr.mxu0 0.0
    %335 = vmatpush2.msra.mxu0 0.0
    %336 = vmatprep.subr.mxu0 0.0
    %337 = vmatpush2.msra.mxu0 0.0
    %338 = vmatprep.subr.mxu0 0.0
    %339 = vmatpush2.msra.mxu0 0.0
    %340 = vmatprep.subr.mxu0 0.0
    %341 = vmatpush2.msra.mxu0 0.0
    %342 = vmatprep.subr.mxu0 0.0
    %343 = vmatpush2.msra.mxu0 0.0
    %344 = vmatprep.subr.mxu0 0.0
    %345 = vmatpush2.msra.mxu0 0.0
    %346 = vmatprep.subr.mxu0 0.0
    %347 = vmatpush2.msra.mxu0 0.0
    %348 = vmatprep.subr.mxu0 0.0
    %349 = vmatpush2.msra.mxu0 0.0
    %350 = vmatprep.subr.mxu0 0.0
    %351 = vmatpush2.msra.mxu0 0.0
    %352 = vmatprep.subr.mxu0 0.0
    %353 = vmatpush2.msra.mxu0 0.0
    %354 = vmatprep.subr.mxu0 0.0
    %355 = vmatpush2.msra.mxu0 0.0
    %356 = vmatprep.mubr.f32.mxu0 0.0
    %357 = vmatmul.mubr.f32.gmra.mxu0 %v268
    %v358 = vpop.f32.mrf.mxu0
    %v359 = vadd.f32 %v290, %v358
    %v360 = vpop.f32.mrf.mxu0
    %361 = vdwg.mxu0
    %v362 = vmax.f32 %v359, 0.0
    %363 = vst [vmem:[#allocation10] sm:$0xff] %v362
    // Predicated region
    $region46: #{tpu_custom_call.1} parent=1 // pred_check
      _
    $region47: #{tpu_custom_call.1} parent=1 // pred_check_branch
      %365 = sbr.rel (0) target = $region49
    $region48: #{tpu_custom_call.1} parent=1 // pred_region
      %s367 = ssub.s32 128, 128
      %368 = vsyncadd [#allocation4], %s367
      %s370 = sshll.u32 [#allocation10], 4
      %s371 = int_to_ptr.vmem [resolvable:$true] %s370
      %373 = dma.vmem_to_hbm [thread:$0]  %s371, 128, %s7, [#allocation4]
    $region49: #{tpu_custom_call.1} parent=1 // pred_fallthru
      _
    // Predicated region
    $region50: #{tpu_custom_call.1} parent=1 // pred_check
      _
    $region51: #{tpu_custom_call.1} parent=1 // pred_check_branch
      %375 = sbr.rel (0) target = $region53
    $region52: #{tpu_custom_call.1} parent=1 // pred_region
      %376 = dma.done [#allocation4], 128
    $region53: #{tpu_custom_call.1} parent=1 // pred_fallthru
      _
    %377 = vsyncpa [#allocation3], 1
    %378 = vsyncpa [#allocation6], 1
    %379 = vsyncpa [#allocation9], 1
    %380 = vsyncpa [#allocation4], 1

</llo_original>
